<compile_context>
chip_gen: v7x
topology: tpu7x:2x2x1
jax: 0.10.0
libtpu: 0.0.40
codegen_flags: <defaults>
</compile_context>

<pallas_src>
import math
import functools

import numpy as np
import jax
import jax.numpy as jnp
from jax.experimental import pallas as pl
from jax.experimental.pallas import tpu as pltpu


def make_gaussian_1d(kernel_size: int = 3, sigma: float = 0.5):
    """Normalized 1D taps; outer(g, g) == the module's normalized 2D kernel."""
    mean = (kernel_size - 1) / 2.0
    xs = np.arange(kernel_size, dtype=np.float64)
    # NOTE: matches the module's exp(-((x-mean)/(2*sigma))**2) formula exactly.
    g = (1.0 / (sigma * math.sqrt(2.0 * math.pi))) * np.exp(
        -(((xs - mean) / (2.0 * sigma)) ** 2))
    g = g / g.sum()
    return tuple(float(v) for v in g)


def make_gaussian_weight(channels: int = 1, kernel_size: int = 3,
                         sigma: float = 0.5, dim: int = 2):
    """Reproduces GaussianSmoothing.__init__ weight construction (dim=2)."""
    ks = [kernel_size] * dim
    sg = [sigma] * dim
    grids = jnp.meshgrid(
        *[jnp.arange(s, dtype=jnp.float32) for s in ks], indexing="ij")
    kernel = jnp.ones(tuple(ks), dtype=jnp.float32)
    for size, std, mgrid in zip(ks, sg, grids):
        mean = (size - 1) / 2.0
        kernel = kernel * (
            1.0 / (std * math.sqrt(2.0 * math.pi))
            * jnp.exp(-(((mgrid - mean) / (2.0 * std)) ** 2)))
    kernel = kernel / jnp.sum(kernel)
    weight = jnp.broadcast_to(kernel, (channels,) + kernel.shape)
    padding = (ks[-1] - 1) // 2
    return weight, padding


def make_tap_weights(H: int, W: int, g1d):
    """Per-lane tap weight rows with the zero halo baked in.

    Row layout: [horizontal taps for offsets -R..-1,+1..+R,
                 vertical   taps for offsets -R..-1,+1..+R], each (H*W,) f32.
    """
    K = len(g1d)
    R = (K - 1) // 2
    HW = H * W
    p = np.arange(HW)
    j = p % W
    offsets = [d for d in range(-R, R + 1) if d != 0]
    rows = []
    for d in offsets:                                 # horizontal (along W)
        valid = (j + d >= 0) & (j + d < W)
        rows.append(np.where(valid, g1d[d + R], 0.0))
    for d in offsets:                                 # vertical (stride W)
        valid = (p + d * W >= 0) & (p + d * W < HW)
        rows.append(np.where(valid, g1d[d + R], 0.0))
    return np.stack(rows).astype(np.float32), tuple(offsets), float(g1d[R])


def _gauss_kernel(w_ref, x_ref, o_ref, *, W, g_center, offsets):
    # w_ref: VMEM (2*(K-1), H*W) f32 per-lane tap weights (halo baked in).
    # x_ref/o_ref: VMEM (tile_p, H*W) -- tile_p flattened (n, c) planes.
    xv = x_ref[...].astype(jnp.float32)               # one load, one cast
    HW = xv.shape[-1]
    n = len(offsets)

    # Horizontal 3-tap pass (separable Gaussian), zero halo via weight rows.
    tmp = g_center * xv
    for t, d in enumerate(offsets):
        v = pltpu.roll(xv, (-d) % HW, axis=1)          # v[p] = x[p + d] (wrapped)
        tmp = tmp + w_ref[t:t + 1, :] * v              # wrap lanes weighted 0

    # Vertical pass: +/- W in the flattened layout.
    out = g_center * tmp
    for t, d in enumerate(offsets):
        v = pltpu.roll(tmp, (-d * W) % HW, axis=1)     # v[p] = tmp[p + d*W]
        out = out + w_ref[n + t:n + t + 1, :] * v

    o_ref[...] = out.astype(o_ref.dtype)


def gaussian_smoothing(x, kernel_size: int = 3, sigma: float = 0.5):
    """x: (N, C, H, W); depthwise Gaussian blur; returns (N, C, H, W)."""
    N, C, H, W = x.shape
    P, HW = N * C, H * W

    g1d = make_gaussian_1d(kernel_size, sigma)
    wrows, offsets, g_center = make_tap_weights(H, W, g1d)
    wvec = jnp.asarray(wrows)                          # (2*(K-1), HW) f32

    xf = x.reshape(P, HW)                              # free reshape; lanes = H*W

    # --- per-generation VMEM budget ------------------------------------------
    try:
        vmem_cap = pltpu.get_tpu_info().vmem_capacity_bytes
    except Exception:
        vmem_cap = 64 * 1024 * 1024                    # conservative (v7x per-TC)
    budget = vmem_cap // 3                             # block footprint target
    vmem_limit = min(vmem_cap * 3 // 4, 96 * 1024 * 1024)

    # --- tile size from the real per-block footprint -------------------------
    itemsize = np.dtype(x.dtype).itemsize
    f32 = 4
    # per flattened plane-row: 2x double-buffered input block + 2x output block
    # + ~5 block-sized f32 temporaries live in the kernel (xv, tmp, out, roll, mul)
    bytes_per_row = HW * (2 * itemsize + 2 * itemsize + 5 * f32)
    max_tile = max(8, (budget // bytes_per_row) // 8 * 8)
    # TODO(synk): if a single 8-row block still exceeds the budget (huge H*W),
    # additionally tile the flattened H*W axis with a +/-W halo (and switch to a
    # (C, H_tile, W) layout for W >= 128) instead of relying on this floor.

    if P <= max_tile:
        if P >= 16:
            # >= 2 grid steps so the "parallel" axis can shard across both v7x TCs.
            tile_p = min(max_tile, ((P + 1) // 2 + 7) // 8 * 8)
            if tile_p >= P:
                tile_p = P
        else:
            tile_p = P                                 # tiny: one full-extent block
    else:
        tile_p = max_tile                              # multiple of 8 sublanes

    grid = (pl.cdiv(P, tile_p),)                       # ragged last block: Pallas masks it
    kernel = functools.partial(_gauss_kernel, W=W, g_center=g_center,
                               offsets=offsets)
    out = pl.pallas_call(
        kernel,
        out_shape=jax.ShapeDtypeStruct((P, HW), x.dtype),
        grid=grid,
        in_specs=[pl.BlockSpec(wvec.shape, lambda i: (0, 0)),
                  pl.BlockSpec((tile_p, HW), lambda i: (i, 0))],
        out_specs=pl.BlockSpec((tile_p, HW), lambda i: (i, 0)),
        compiler_params=pltpu.CompilerParams(
            dimension_semantics=("parallel",),
            vmem_limit_bytes=int(vmem_limit),
        ),
    )(wvec, xf)
    return out.reshape(N, C, H, W)


def _reference(x, weight2d, padding):
    """Pure-JAX depthwise conv reference (== F.conv2d with groups=C)."""
    C = x.shape[1]
    w = weight2d[:, None, :, :]  # (C, 1, K, K) == torch depthwise weight
    return jax.lax.conv_general_dilated(
        x, w,
        window_strides=(1, 1),
        padding=[(padding, padding), (padding, padding)],
        dimension_numbers=("NCHW", "OIHW", "NCHW"),
        feature_group_count=C,
    )


if __name__ == "__main__":
    N, C, H, W = 2, 4, 16, 16
    key = jax.random.PRNGKey(0)
    x = jax.random.normal(key, (N, C, H, W), dtype=jnp.float32)

    out = gaussian_smoothing(x, kernel_size=3, sigma=0.5)
    out = jax.block_until_ready(out)

    weight2d, padding = make_gaussian_weight(channels=C, kernel_size=3,
                                             sigma=0.5, dim=2)
    ref = _reference(x, weight2d, padding)
    assert out.shape == (N, C, H, W)
    assert jnp.allclose(out, ref, atol=1e-5, rtol=1e-5)
    print("KERNEL_OK")
</pallas_src>

<mosaic_0001>
module attributes {stable_mosaic.version = 11 : i64} {
  func.func @_gauss_kernel(%arg0: i32, %arg1: memref<4x256xf32, #tpu.memory_space<vmem>>, %arg2: memref<8x256xf32, #tpu.memory_space<vmem>>, %arg3: memref<8x256xf32, #tpu.memory_space<vmem>>) attributes {dimension_semantics = [#tpu.dimension_semantics<parallel>], iteration_bounds = array<i64: 1>, scalar_prefetch = 0 : i64, scratch_operands = 0 : i64, tpu.core_type = #tpu.core_type<tc>, window_params = [{pipeline_mode = #tpu.pipeline_mode<synchronous>, transform_indices = @transform_0, window_bounds = array<i64: 4, 256>}, {transform_indices = @transform_1, window_bounds = array<i64: 8, 256>}, {transform_indices = @transform_2, window_bounds = array<i64: 8, 256>}]} {
    %c0 = arith.constant 0 : index
    %c0_0 = arith.constant 0 : index
    %0 = vector.load %arg2[%c0, %c0_0] : memref<8x256xf32, #tpu.memory_space<vmem>>, vector<8x256xf32>
    %cst = arith.constant 0.57611686 : f32
    %1 = vector.broadcast %cst : f32 to vector<8x256xf32>
    %2 = arith.mulf %1, %0 : vector<8x256xf32>
    %c1_i32 = arith.constant 1 : i32
    %3 = tpu.dynamic_rotate %0 by %c1_i32 dim 1 : vector<8x256xf32>, i32 -> vector<8x256xf32>
    %c0_1 = arith.constant 0 : index
    %c0_2 = arith.constant 0 : index
    %4 = vector.load %arg1[%c0_1, %c0_2] : memref<4x256xf32, #tpu.memory_space<vmem>>, vector<1x256xf32>
    %5 = vector.broadcast %4 : vector<1x256xf32> to vector<8x256xf32>
    %6 = arith.mulf %5, %3 : vector<8x256xf32>
    %7 = arith.addf %2, %6 : vector<8x256xf32>
    %c255_i32 = arith.constant 255 : i32
    %8 = tpu.dynamic_rotate %0 by %c255_i32 dim 1 : vector<8x256xf32>, i32 -> vector<8x256xf32>
    %c1 = arith.constant 1 : index
    %c0_3 = arith.constant 0 : index
    %9 = vector.load %arg1[%c1, %c0_3] : memref<4x256xf32, #tpu.memory_space<vmem>>, vector<1x256xf32>
    %10 = vector.broadcast %9 : vector<1x256xf32> to vector<8x256xf32>
    %11 = arith.mulf %10, %8 : vector<8x256xf32>
    %12 = arith.addf %7, %11 : vector<8x256xf32>
    %cst_4 = arith.constant 0.57611686 : f32
    %13 = vector.broadcast %cst_4 : f32 to vector<8x256xf32>
    %14 = arith.mulf %13, %12 : vector<8x256xf32>
    %c16_i32 = arith.constant 16 : i32
    %15 = tpu.dynamic_rotate %12 by %c16_i32 dim 1 : vector<8x256xf32>, i32 -> vector<8x256xf32>
    %c2 = arith.constant 2 : index
    %c0_5 = arith.constant 0 : index
    %16 = vector.load %arg1[%c2, %c0_5] : memref<4x256xf32, #tpu.memory_space<vmem>>, vector<1x256xf32>
    %17 = vector.broadcast %16 : vector<1x256xf32> to vector<8x256xf32>
    %18 = arith.mulf %17, %15 : vector<8x256xf32>
    %19 = arith.addf %14, %18 : vector<8x256xf32>
    %c240_i32 = arith.constant 240 : i32
    %20 = tpu.dynamic_rotate %12 by %c240_i32 dim 1 : vector<8x256xf32>, i32 -> vector<8x256xf32>
    %c3 = arith.constant 3 : index
    %c0_6 = arith.constant 0 : index
    %21 = vector.load %arg1[%c3, %c0_6] : memref<4x256xf32, #tpu.memory_space<vmem>>, vector<1x256xf32>
    %22 = vector.broadcast %21 : vector<1x256xf32> to vector<8x256xf32>
    %23 = arith.mulf %22, %20 : vector<8x256xf32>
    %24 = arith.addf %19, %23 : vector<8x256xf32>
    %c0_7 = arith.constant 0 : index
    %c0_8 = arith.constant 0 : index
    %25 = vector.load %arg3[%c0_7, %c0_8] : memref<8x256xf32, #tpu.memory_space<vmem>>, vector<8x256xf32>
    tpu.vector_store %arg3[%c0_7, %c0_8], %24 {strides = array<i32>} : memref<8x256xf32, #tpu.memory_space<vmem>>, vector<8x256xf32>,
    return
  }
  func.func @transform_0(%arg0: i32) -> (i32, i32) {
    %c0_i32 = arith.constant 0 : i32
    %c0_i32_0 = arith.constant 0 : i32
    %c0_i32_1 = arith.constant 0 : i32
    return %c0_i32, %c0_i32_0 : i32, i32
  }
  func.func @transform_1(%arg0: i32) -> (i32, i32) {
    %c0_i32 = arith.constant 0 : i32
    %c0_i32_0 = arith.constant 0 : i32
    return %arg0, %c0_i32 : i32, i32
  }
  func.func @transform_2(%arg0: i32) -> (i32, i32) {
    %c0_i32 = arith.constant 0 : i32
    %c0_i32_0 = arith.constant 0 : i32
    return %arg0, %c0_i32 : i32, i32
  }
}

</mosaic_0001>

<llo_original>
// kernel: tpu_custom_call.1
$region0: #{tpu_custom_call.1}
  #allocation0 [shape = 'u32[]', space=smem, size = 0x4, offset = 0x4, fixed_abs, tag = 'smem constant byte address 0x4 - core index']
  #allocation1 [shape = 'u32[144,128]{1,0:T(1,128)}', space=vmem, size = 0x12000, scoped, tag = 'internal scratch']
  %s0 = inlined_call_operand.hbm [shape: f32[4,256], index: 0, kind: input, shape index: {}]
  %s1 = inlined_call_operand.hbm [shape: f32[8,256], index: 1, kind: input, shape index: {}]
  %s2 = inlined_call_operand.hbm [shape: f32[8,256], index: 2, kind: output, shape index: {}]
  %s3 = sld [smem:[#allocation0]]
  $region26: #{tpu_custom_call.1} parent=0
    _
  %s5 = ssub.s32 1, %s3
  %s6 = scalar_select 0, %s5, %s3
  $region1: #{tpu_custom_call.1} parent=0
    #allocation2 [shape = 'u8[4096]{0}', space=vmem, size = 0x1000, scoped, tag = 'input window, operand 0, single buffered']
    #allocation3 [shape = 's32[1]{0}', space=sflag, size = 0x4, scoped, tag = 'scoped memory for tpu_custom_call.1']
    #allocation4 [shape = 's32[1]{0}', space=sflag, size = 0x4, scoped, tag = 'scoped memory for tpu_custom_call.1']
    #allocation5 [shape = 'u8[8192]{0}', space=vmem, size = 0x2000, scoped, tag = 'input window, operand 1, single buffered']
    #allocation6 [shape = 's32[1]{0}', space=sflag, size = 0x4, scoped, tag = 'scoped memory for tpu_custom_call.1']
    #allocation7 [shape = 'u8[8192]{0}', space=vmem, size = 0x2000, scoped, tag = 'output window, operand 0, single buffered']
    %7 = vsyncpa [#allocation3], 0
    %8 = vsyncpa [#allocation6], 0
    %9 = vsyncpa [#allocation4], 0
    // Predicated region
    $region2: #{tpu_custom_call.1} parent=1 // pred_check
      _
    $region3: #{tpu_custom_call.1} parent=1 // pred_check_branch
      %11 = sbr.rel (0) target = $region5
    $region4: #{tpu_custom_call.1} parent=1 // pred_region
      %s13 = ssub.s32 128, 128
      %14 = vsyncadd [#allocation3], %s13
      %s16 = sshll.u32 [#allocation2], 4
      %s17 = int_to_ptr.vmem [resolvable:$true] %s16
      %19 = dma.hbm_to_vmem [thread:$0]  %s0, 128, %s17, [#allocation3]
    $region5: #{tpu_custom_call.1} parent=1 // pred_fallthru
      _
    // Predicated region
    $region6: #{tpu_custom_call.1} parent=1 // pred_check
      _
    $region7: #{tpu_custom_call.1} parent=1 // pred_check_branch
      %21 = sbr.rel (0) target = $region9
    $region8: #{tpu_custom_call.1} parent=1 // pred_region
      %s23 = ssub.s32 256, 256
      %24 = vsyncadd [#allocation6], %s23
      %s26 = sshll.u32 [#allocation5], 4
      %s27 = int_to_ptr.vmem [resolvable:$true] %s26
      %29 = dma.hbm_to_vmem [thread:$0]  %s1, 256, %s27, [#allocation6]
    $region9: #{tpu_custom_call.1} parent=1 // pred_fallthru
      _
    // Predicated region
    $region10: #{tpu_custom_call.1} parent=1 // pred_check
      _
    $region11: #{tpu_custom_call.1} parent=1 // pred_check_branch
      %31 = sbr.rel (0) target = $region13
    $region12: #{tpu_custom_call.1} parent=1 // pred_region
      %32 = dma.done [#allocation3], 128
    $region13: #{tpu_custom_call.1} parent=1 // pred_fallthru
      _
    // Predicated region
    $region14: #{tpu_custom_call.1} parent=1 // pred_check
      _
    $region15: #{tpu_custom_call.1} parent=1 // pred_check_branch
      %34 = sbr.rel (0) target = $region17
    $region16: #{tpu_custom_call.1} parent=1 // pred_region
      %35 = dma.done [#allocation6], 256
    $region17: #{tpu_custom_call.1} parent=1 // pred_fallthru
      _
    %v36 = vld [vmem:[#allocation5] sm:$0xff]
    %v37 = vld [vmem:[#allocation5 + $0x8] sm:$0xff]
    %v38 = vmul.f32 %v36, 0.57611686
    %v39 = vmul.f32 %v37, 0.57611686
    %40 = vrot.lane.b32.xlu0 %v36, 1
    %v41 = vpop.permute.xlu0 %40
    %42 = vrot.lane.b32.xlu0 %v37, 1
    %v43 = vpop.permute.xlu0 %42
    %v44 = vlaneseq
    %v45 = vand.u32 %v44, 127
    %vm46 = vcmp.lt.s32.totalorder %v45, 1
    %v47 = vsel %vm46, %v41, %v43
    %v48 = vsel %vm46, %v43, %v41
    %v49 = vld [vmem:[#allocation2] ss:$4 sm:$0x3]
    %v51 = vlaneseq
    %v52 = vshrl.u32 %v51, 7
    %v53 = vsub.s32 0, %v52
    %v54 = vrot.slane %v49, %v53
    %v55 = vlaneseq
    %v56 = vshrl.u32 %v55, 7
    %v57 = vsub.s32 1, %v56
    %v58 = vrot.slane %v49, %v57
    %v61 = vmul.f32 %v54, %v48
    %v62 = vmul.f32 %v58, %v47
    %v63 = vadd.f32 %v38, %v61
    %v64 = vadd.f32 %v39, %v62
    %65 = vrot.lane.b32.xlu0 %v36, 127
    %v66 = vpop.permute.xlu0 %65
    %67 = vrot.lane.b32.xlu0 %v37, 127
    %v68 = vpop.permute.xlu0 %67
    %vm69 = vcmp.lt.s32.totalorder %v45, 127
    %v70 = vsel %vm69, %v66, %v68
    %v71 = vsel %vm69, %v68, %v66
    %s72 = scalar_lea.vmem [#allocation2], 1
    %v73 = vld [vmem:[%s72] ss:$4 sm:$0x3]
    %v75 = vlaneseq
    %v76 = vshrl.u32 %v75, 7
    %v77 = vsub.s32 0, %v76
    %v78 = vrot.slane %v73, %v77
    %v79 = vlaneseq
    %v80 = vshrl.u32 %v79, 7
    %v81 = vsub.s32 1, %v80
    %v82 = vrot.slane %v73, %v81
    %v85 = vmul.f32 %v78, %v70
    %v86 = vmul.f32 %v82, %v71
    %v87 = vadd.f32 %v63, %v85
    %v88 = vadd.f32 %v64, %v86
    %v89 = vmul.f32 %v87, 0.57611686
    %v90 = vmul.f32 %v88, 0.57611686
    %91 = vrot.lane.b32.xlu0 %v87, 16
    %v92 = vpop.permute.xlu0 %91
    %93 = vrot.lane.b32.xlu0 %v88, 16
    %v94 = vpop.permute.xlu0 %93
    %vm95 = vcmp.lt.s32.totalorder %v45, 16
    %v96 = vsel %vm95, %v92, %v94
    %v97 = vsel %vm95, %v94, %v92
    %s98 = scalar_lea.vmem [#allocation2], 2
    %v99 = vld [vmem:[%s98] ss:$4 sm:$0x3]
    %v101 = vlaneseq
    %v102 = vshrl.u32 %v101, 7
    %v103 = vsub.s32 0, %v102
    %v104 = vrot.slane %v99, %v103
    %v105 = vlaneseq
    %v106 = vshrl.u32 %v105, 7
    %v107 = vsub.s32 1, %v106
    %v108 = vrot.slane %v99, %v107
    %v111 = vmul.f32 %v104, %v97
    %v112 = vmul.f32 %v108, %v96
    %v113 = vadd.f32 %v89, %v111
    %v114 = vadd.f32 %v90, %v112
    %115 = vrot.lane.b32.xlu0 %v87, 112
    %v116 = vpop.permute.xlu0 %115
    %117 = vrot.lane.b32.xlu0 %v88, 112
    %v118 = vpop.permute.xlu0 %117
    %vm119 = vcmp.lt.s32.totalorder %v45, 112
    %v120 = vsel %vm119, %v116, %v118
    %v121 = vsel %vm119, %v118, %v116
    %s122 = scalar_lea.vmem [#allocation2], 3
    %v123 = vld [vmem:[%s122] ss:$4 sm:$0x3]
    %v125 = vlaneseq
    %v126 = vshrl.u32 %v125, 7
    %v127 = vsub.s32 0, %v126
    %v128 = vrot.slane %v123, %v127
    %v129 = vlaneseq
    %v130 = vshrl.u32 %v129, 7
    %v131 = vsub.s32 1, %v130
    %v132 = vrot.slane %v123, %v131
    %v135 = vmul.f32 %v128, %v120
    %v136 = vmul.f32 %v132, %v121
    %v137 = vadd.f32 %v113, %v135
    %v138 = vadd.f32 %v114, %v136
    %139 = vst [vmem:[#allocation7] sm:$0xff] %v137
    %140 = vst [vmem:[#allocation7 + $0x8] sm:$0xff] %v138
    // Predicated region
    $region18: #{tpu_custom_call.1} parent=1 // pred_check
      _
    $region19: #{tpu_custom_call.1} parent=1 // pred_check_branch
      %142 = sbr.rel (0) target = $region21
    $region20: #{tpu_custom_call.1} parent=1 // pred_region
      %s144 = ssub.s32 256, 256
      %145 = vsyncadd [#allocation4], %s144
      %s147 = sshll.u32 [#allocation7], 4
      %s148 = int_to_ptr.vmem [resolvable:$true] %s147
      %150 = dma.vmem_to_hbm [thread:$0]  %s148, 256, %s2, [#allocation4]
    $region21: #{tpu_custom_call.1} parent=1 // pred_fallthru
      _
    // Predicated region
    $region22: #{tpu_custom_call.1} parent=1 // pred_check
      _
    $region23: #{tpu_custom_call.1} parent=1 // pred_check_branch
      %152 = sbr.rel (0) target = $region25
    $region24: #{tpu_custom_call.1} parent=1 // pred_region
      %153 = dma.done [#allocation4], 256
    $region25: #{tpu_custom_call.1} parent=1 // pred_fallthru
      _
    %154 = vsyncpa [#allocation3], 1
    %155 = vsyncpa [#allocation6], 1
    %156 = vsyncpa [#allocation4], 1

</llo_original>
